<compile_context>
chip_gen: v5e
topology: v5e:2x2
jax: 0.10.0
libtpu: 0.0.40
codegen_flags: <defaults>
</compile_context>

<pallas_src>
import jax
import jax.numpy as jnp
from jax.experimental import pallas as pl
from jax.experimental.pallas import tpu as pltpu

_LANE = 128
_MIB = 1024 * 1024


def _round_up(x, m):
    return ((x + m - 1) // m) * m


def _cdiv(a, b):
    return -(-a // b)


def _vmem_capacity_bytes():
    try:
        return int(pltpu.get_tpu_info().vmem_capacity_bytes)
    except Exception:
        return 64 * _MIB  # conservative fallback: v7x per-TensorCore VMEM


# ---------------------------------------------------------------------------
# Kernels
# ---------------------------------------------------------------------------
def mlp_kernel_resident(x_ref, w1_ref, b1_ref, w2_ref, b2_ref, o_ref):
    """Both weight matrices VMEM-resident; one batch tile per grid step."""
    h = jnp.dot(x_ref[...], w1_ref[...], preferred_element_type=jnp.float32)
    h = jnp.maximum(h + b1_ref[...], 0.0)                      # f32 epilogue (v5e-safe)
    y = jnp.dot(h.astype(w2_ref.dtype), w2_ref[...],
                preferred_element_type=jnp.float32)
    o_ref[...] = (y + b2_ref[...]).astype(o_ref.dtype)


def mlp_kernel_ntiled(x_ref, w1_ref, b1_ref, w2_ref, b2_ref, o_ref, h_ref):
    """Fallback when W2 does not fit VMEM: grid = (batch tiles, N tiles).

    The f32 ReLU intermediate h is computed once per batch tile (j == 0) and kept in
    scratch; W2 / b2 / out stream over the N axis ("arbitrary")."""
    @pl.when(pl.program_id(1) == 0)
    def _():
        h = jnp.dot(x_ref[...], w1_ref[...], preferred_element_type=jnp.float32)
        h_ref[...] = jnp.maximum(h + b1_ref[...], 0.0)

    y = jnp.dot(h_ref[...].astype(w2_ref.dtype), w2_ref[...],
                preferred_element_type=jnp.float32)
    o_ref[...] = (y + b2_ref[...]).astype(o_ref.dtype)


# ---------------------------------------------------------------------------
# Wrapper
# ---------------------------------------------------------------------------
def pad_mlp_params(w1, b1, w2, b2, *, lane=_LANE):
    """Pad the (in, out)-layout weights/biases once at load time (not per forward)."""
    K, H = w1.shape
    N = w2.shape[1]
    Hp = _round_up(H, lane)
    Np = _round_up(N, lane)
    w1p = jnp.zeros((K, Hp), w1.dtype).at[:, :H].set(w1)
    b1p = jnp.zeros((1, Hp), jnp.float32).at[:, :H].set(
        jnp.asarray(b1, jnp.float32).reshape(1, H))
    w2p = jnp.zeros((Hp, Np), w2.dtype).at[:H, :N].set(w2)
    b2p = jnp.zeros((1, Np), jnp.float32).at[:, :N].set(
        jnp.asarray(b2, jnp.float32).reshape(1, N))
    return dict(w1=w1p, b1=b1p, w2=w2p, b2=b2p, K=K, H=H, N=N, Hp=Hp, Np=Np)


def mlp_forward(x, params, *, block_b=512, block_n=512, force_tiled=False):
    """relu(x @ W1 + b1) @ W2 + b2 using pre-padded params (see pad_mlp_params)."""
    B, K = x.shape
    assert K == params["K"], f"expected input size {params['K']}, got {K}"
    Hp, Np, N = params["Hp"], params["Np"], params["N"]
    w1p, b1p, w2p, b2p = params["w1"], params["b1"], params["w2"], params["b2"]

    out_dtype = x.dtype
    xs = jnp.dtype(x.dtype).itemsize
    ws = jnp.dtype(w1p.dtype).itemsize
    os_ = jnp.dtype(out_dtype).itemsize

    # Batch tiling: multiple-of-8 tiles, >= 2 tiles when possible so the "parallel"
    # batch axis actually feeds both v7x TensorCores.
    if B >= 16:
        nb = max(2, _cdiv(B, block_b))
    else:
        nb = 1
    tb = _round_up(_cdiv(B, nb), 8)
    Bp = _round_up(B, tb)
    nb = Bp // tb

    # Generation-aware VMEM budget (v5e/v6e: 128 MiB, v7x: 64 MiB per TC).
    cap = _vmem_capacity_bytes()
    budget = int(cap * 0.8)  # headroom for Mosaic internal scratch

    w_bytes = (K * Hp + Hp * Np) * ws
    bias_bytes = (Hp + Np) * 4
    resident_bytes = (w_bytes + bias_bytes               # weights x1 (Buffered(1))
                      + 2 * tb * K * xs                  # x tiles (double buffered)
                      + 2 * tb * Np * os_                # out tiles (double buffered)
                      + tb * Hp * 4 + tb * Np * 4)       # f32 intermediates

    flops = 2 * Bp * (K * Hp + Hp * Np)
    bytes_accessed = Bp * K * xs + w_bytes + bias_bytes + Bp * Np * os_
    cost = pl.CostEstimate(flops=flops, transcendentals=0,
                           bytes_accessed=bytes_accessed)

    # Pad the batch only when needed (no per-call copy in the common case).
    xp = x if Bp == B else jnp.zeros((Bp, K), x.dtype).at[:B, :].set(x)

    resident_ok = (not force_tiled) and resident_bytes <= budget

    if resident_ok:
        vmem_limit = min(int(cap * 0.9), max(resident_bytes + 8 * _MIB, 32 * _MIB))
        out = pl.pallas_call(
            mlp_kernel_resident,
            out_shape=jax.ShapeDtypeStruct((Bp, Np), out_dtype),
            grid=(nb,),
            in_specs=[
                pl.BlockSpec((tb, K), lambda i: (i, 0)),        # x: streams over batch
                pl.BlockSpec((K, Hp), lambda i: (0, 0),
                             pipeline_mode=pl.Buffered(1)),     # W1: resident, single buffer
                pl.BlockSpec((1, Hp), lambda i: (0, 0),
                             pipeline_mode=pl.Buffered(1)),     # b1: resident (f32)
                pl.BlockSpec((Hp, Np), lambda i: (0, 0),
                             pipeline_mode=pl.Buffered(1)),     # W2: resident, single buffer
                pl.BlockSpec((1, Np), lambda i: (0, 0),
                             pipeline_mode=pl.Buffered(1)),     # b2: resident (f32)
            ],
            out_specs=pl.BlockSpec((tb, Np), lambda i: (i, 0)),
            compiler_params=pltpu.CompilerParams(
                dimension_semantics=("parallel",),              # v7x: 2 TCs split batch
                vmem_limit_bytes=vmem_limit),
            cost_estimate=cost,
        )(xp, w1p, b1p, w2p, b2p)
    else:
        # Tiled fallback (e.g. weights too big for v7x's 64 MiB): stream W2/b2/out over N.
        # TODO(synk): also tile K (f32 accumulator + "arbitrary" K axis) if W1 alone
        # exceeds the VMEM budget.
        def tiled_bytes(tn_):
            return (K * Hp * ws + Hp * 4                  # W1 + b1 resident (single buffer)
                    + 2 * (Hp * tn_ * ws + tn_ * 4)       # W2 + b2 streamed (double buffered)
                    + 2 * tb * K * xs                     # x tiles
                    + 2 * tb * tn_ * os_                  # out tiles
                    + tb * Hp * 4)                        # f32 h scratch

        n_lane_blocks = Np // _LANE
        tn = _LANE
        for d in range(n_lane_blocks, 0, -1):             # largest divisor tile that fits
            if n_lane_blocks % d:
                continue
            cand = d * _LANE
            if cand <= block_n and tiled_bytes(cand) <= budget:
                tn = cand
                break
        nn = Np // tn
        vmem_limit = min(int(cap * 0.9), max(tiled_bytes(tn) + 8 * _MIB, 32 * _MIB))

        out = pl.pallas_call(
            mlp_kernel_ntiled,
            out_shape=jax.ShapeDtypeStruct((Bp, Np), out_dtype),
            grid=(nb, nn),
            in_specs=[
                pl.BlockSpec((tb, K), lambda i, j: (i, 0)),
                pl.BlockSpec((K, Hp), lambda i, j: (0, 0),
                             pipeline_mode=pl.Buffered(1)),
                pl.BlockSpec((1, Hp), lambda i, j: (0, 0),
                             pipeline_mode=pl.Buffered(1)),
                pl.BlockSpec((Hp, tn), lambda i, j: (0, j)),    # W2 streams over N
                pl.BlockSpec((1, tn), lambda i, j: (0, j)),
            ],
            out_specs=pl.BlockSpec((tb, tn), lambda i, j: (i, j)),
            scratch_shapes=[pltpu.VMEM((tb, Hp), jnp.float32)],
            compiler_params=pltpu.CompilerParams(
                dimension_semantics=("parallel", "arbitrary"),
                vmem_limit_bytes=vmem_limit),
            cost_estimate=cost,
        )(xp, w1p, b1p, w2p, b2p)

    return out[:B, :N]


def init_linear(key, fan_in, fan_out, dtype=jnp.float32):
    # PyTorch nn.Linear default init: U(-1/sqrt(fan_in), 1/sqrt(fan_in)).
    kw, kb = jax.random.split(key)
    bound = 1.0 / float(fan_in) ** 0.5
    # Stored as (in, out) so the kernel does x @ W directly.
    w = jax.random.uniform(kw, (fan_in, fan_out), dtype, -bound, bound)
    b = jax.random.uniform(kb, (fan_out,), dtype, -bound, bound)
    return w, b


if __name__ == "__main__":
    key = jax.random.PRNGKey(0)
    k_x, k_l1, k_l2, k_l3, k_big = jax.random.split(key, 5)

    input_size, hidden_size, output_size = 32, 8, 2
    w1, b1 = init_linear(k_l1, input_size, hidden_size)
    w2, b2 = init_linear(k_l2, hidden_size, output_size)
    params = pad_mlp_params(w1, b1, w2, b2)        # pad once, reuse every forward

    def ref(x, _w2=w2, _b2=b2):
        return jnp.maximum(x @ w1 + b1, 0.0) @ _w2 + _b2

    # 1) small batch, f32, single grid step (strict tolerance).
    x_small = jax.random.normal(k_x, (8, input_size), jnp.float32)
    out_small = mlp_forward(x_small, params)
    jax.block_until_ready(out_small)
    assert out_small.shape == (8, output_size)
    assert jnp.allclose(out_small, ref(x_small), atol=1e-5, rtol=1e-5)

    # 2) larger batch: multi-tile "parallel" batch axis (2 tiles of 256 rows),
    #    weights resident / single-buffered, activations streaming, no x padding copy.
    x_big = jax.random.normal(k_big, (512, input_size), jnp.float32)
    out_big = mlp_forward(x_big, params)
    jax.block_until_ready(out_big)
    assert out_big.shape == (512, output_size)
    assert jnp.allclose(out_big, ref(x_big), atol=1e-5, rtol=1e-5)

    # 3) bf16 MXU-input path: bf16 x / weights (padded once), f32 accumulation +
    #    f32 bias/ReLU epilogue. h is truncated f32->bf16 between the two GEMMs, so a
    #    looser tolerance vs. the pure-f32 reference is expected.
    params_bf16 = pad_mlp_params(w1.astype(jnp.bfloat16), b1,
                                 w2.astype(jnp.bfloat16), b2)
    out_bf16 = mlp_forward(x_big.astype(jnp.bfloat16), params_bf16)
    jax.block_until_ready(out_bf16)
    assert jnp.allclose(out_bf16.astype(jnp.float32), ref(x_big),
                        atol=5e-2, rtol=5e-2)

    # 4) tiled-N fallback path (the one v7x takes when the weights exceed its VMEM
    #    budget): wider output layer so Np = 256 splits into two 128-wide N tiles.
    w2_wide, b2_wide = init_linear(k_l3, hidden_size, 200)
    params_wide = pad_mlp_params(w1, b1, w2_wide, b2_wide)
    out_tiled = mlp_forward(x_big, params_wide, block_n=128, force_tiled=True)
    jax.block_until_ready(out_tiled)
    assert out_tiled.shape == (512, 200)
    assert jnp.allclose(out_tiled, ref(x_big, w2_wide, b2_wide),
                        atol=1e-5, rtol=1e-5)

    print("KERNEL_OK")
</pallas_src>

<mosaic_0001>
module attributes {stable_mosaic.version = 11 : i64} {
  func.func @mlp_kernel_resident(%arg0: i32, %arg1: memref<8x32xf32, #tpu.memory_space<vmem>>, %arg2: memref<32x128xf32, #tpu.memory_space<vmem>>, %arg3: memref<1x128xf32, #tpu.memory_space<vmem>>, %arg4: memref<128x128xf32, #tpu.memory_space<vmem>>, %arg5: memref<1x128xf32, #tpu.memory_space<vmem>>, %arg6: memref<8x128xf32, #tpu.memory_space<vmem>>) attributes {dimension_semantics = [#tpu.dimension_semantics<parallel>], iteration_bounds = array<i64: 1>, scalar_prefetch = 0 : i64, scratch_operands = 0 : i64, tpu.core_type = #tpu.core_type<tc>, window_params = [{transform_indices = @transform_0, window_bounds = array<i64: 8, 32>}, {pipeline_mode = #tpu.pipeline_mode<synchronous>, transform_indices = @transform_1, window_bounds = array<i64: 32, 128>}, {pipeline_mode = #tpu.pipeline_mode<synchronous>, transform_indices = @transform_2, window_bounds = array<i64: 1, 128>}, {pipeline_mode = #tpu.pipeline_mode<synchronous>, transform_indices = @transform_3, window_bounds = array<i64: 128, 128>}, {pipeline_mode = #tpu.pipeline_mode<synchronous>, transform_indices = @transform_4, window_bounds = array<i64: 1, 128>}, {transform_indices = @transform_5, window_bounds = array<i64: 8, 128>}]} {
    %c0 = arith.constant 0 : index
    %c0_0 = arith.constant 0 : index
    %0 = vector.load %arg1[%c0, %c0_0] : memref<8x32xf32, #tpu.memory_space<vmem>>, vector<8x32xf32>
    %c0_1 = arith.constant 0 : index
    %c0_2 = arith.constant 0 : index
    %1 = vector.load %arg2[%c0_1, %c0_2] : memref<32x128xf32, #tpu.memory_space<vmem>>, vector<32x128xf32>
    %cst = arith.constant dense<0.000000e+00> : vector<8x128xf32>
    %2 = tpu.matmul %0, %1, %cst {dimension_numbers = #tpu.dot_dimension_numbers<[1], [0], [0], [1], [0, 0, 1, 1], [], []>} : vector<8x32xf32>, vector<32x128xf32>, vector<8x128xf32> -> vector<8x128xf32>
    %c0_3 = arith.constant 0 : index
    %c0_4 = arith.constant 0 : index
    %3 = vector.load %arg3[%c0_3, %c0_4] : memref<1x128xf32, #tpu.memory_space<vmem>>, vector<1x128xf32>
    %4 = vector.broadcast %3 : vector<1x128xf32> to vector<8x128xf32>
    %5 = arith.addf %2, %4 : vector<8x128xf32>
    %cst_5 = arith.constant 0.000000e+00 : f32
    %6 = vector.broadcast %cst_5 : f32 to vector<8x128xf32>
    %7 = arith.maximumf %5, %6 : vector<8x128xf32>
    %c0_6 = arith.constant 0 : index
    %c0_7 = arith.constant 0 : index
    %8 = vector.load %arg4[%c0_6, %c0_7] : memref<128x128xf32, #tpu.memory_space<vmem>>, vector<128x128xf32>
    %cst_8 = arith.constant dense<0.000000e+00> : vector<8x128xf32>
    %9 = tpu.matmul %7, %8, %cst_8 {dimension_numbers = #tpu.dot_dimension_numbers<[1], [0], [0], [1], [0, 0, 1, 1], [], []>} : vector<8x128xf32>, vector<128x128xf32>, vector<8x128xf32> -> vector<8x128xf32>
    %c0_9 = arith.constant 0 : index
    %c0_10 = arith.constant 0 : index
    %10 = vector.load %arg5[%c0_9, %c0_10] : memref<1x128xf32, #tpu.memory_space<vmem>>, vector<1x128xf32>
    %11 = vector.broadcast %10 : vector<1x128xf32> to vector<8x128xf32>
    %12 = arith.addf %9, %11 : vector<8x128xf32>
    %c0_11 = arith.constant 0 : index
    %c0_12 = arith.constant 0 : index
    %13 = vector.load %arg6[%c0_11, %c0_12] : memref<8x128xf32, #tpu.memory_space<vmem>>, vector<8x128xf32>
    tpu.vector_store %arg6[%c0_11, %c0_12], %12 {strides = array<i32>} : memref<8x128xf32, #tpu.memory_space<vmem>>, vector<8x128xf32>,
    return
  }
  func.func @transform_0(%arg0: i32) -> (i32, i32) {
    %c0_i32 = arith.constant 0 : i32
    %c0_i32_0 = arith.constant 0 : i32
    return %arg0, %c0_i32 : i32, i32
  }
  func.func @transform_1(%arg0: i32) -> (i32, i32) {
    %c0_i32 = arith.constant 0 : i32
    %c0_i32_0 = arith.constant 0 : i32
    %c0_i32_1 = arith.constant 0 : i32
    return %c0_i32, %c0_i32_0 : i32, i32
  }
  func.func @transform_2(%arg0: i32) -> (i32, i32) {
    %c0_i32 = arith.constant 0 : i32
    %c0_i32_0 = arith.constant 0 : i32
    %c0_i32_1 = arith.constant 0 : i32
    return %c0_i32, %c0_i32_0 : i32, i32
  }
  func.func @transform_3(%arg0: i32) -> (i32, i32) {
    %c0_i32 = arith.constant 0 : i32
    %c0_i32_0 = arith.constant 0 : i32
    %c0_i32_1 = arith.constant 0 : i32
    return %c0_i32, %c0_i32_0 : i32, i32
  }
  func.func @transform_4(%arg0: i32) -> (i32, i32) {
    %c0_i32 = arith.constant 0 : i32
    %c0_i32_0 = arith.constant 0 : i32
    %c0_i32_1 = arith.constant 0 : i32
    return %c0_i32, %c0_i32_0 : i32, i32
  }
  func.func @transform_5(%arg0: i32) -> (i32, i32) {
    %c0_i32 = arith.constant 0 : i32
    %c0_i32_0 = arith.constant 0 : i32
    return %arg0, %c0_i32 : i32, i32
  }
}

</mosaic_0001>

<llo_original>
// kernel: tpu_custom_call.1
$region0: #{tpu_custom_call.1}
  #allocation0 [shape = 'u32[]', space=smem, size = 0x4, offset = 0x4, fixed_abs, tag = 'smem constant byte address 0x4 - core index']
  #allocation1 [shape = 'u32[72,128]{1,0:T(1,128)}', space=vmem, size = 0x9000, scoped, tag = 'internal scratch']
  %s0 = inlined_call_operand.hbm [shape: f32[8,32], index: 0, kind: input, shape index: {}]
  %s1 = inlined_call_operand.hbm [shape: f32[32,128], index: 1, kind: input, shape index: {}]
  %s2 = inlined_call_operand.vmem [shape: f32[1,128], index: 2, kind: input, shape index: {}]
  %s3 = inlined_call_operand.hbm [shape: f32[128,128], index: 3, kind: input, shape index: {}]
  %s4 = inlined_call_operand.vmem [shape: f32[1,128], index: 4, kind: input, shape index: {}]
  %s5 = inlined_call_operand.hbm [shape: f32[8,128], index: 5, kind: output, shape index: {}]
  %s6 = sld [smem:[#allocation0]]
  $region42: #{tpu_custom_call.1} parent=0
    _
  %s8 = ssub.s32 1, %s6
  %s9 = scalar_select 0, %s8, %s6
  $region1: #{tpu_custom_call.1} parent=0
    #allocation2 [shape = 'u8[4096]{0}', space=vmem, size = 0x1000, scoped, tag = 'input window, operand 0, single buffered']
    #allocation3 [shape = 's32[1]{0}', space=sflag, size = 0x4, scoped, tag = 'scoped memory for tpu_custom_call.1']
    #allocation4 [shape = 's32[1]{0}', space=sflag, size = 0x4, scoped, tag = 'scoped memory for tpu_custom_call.1']
    #allocation5 [shape = 'u8[16384]{0}', space=vmem, size = 0x4000, scoped, tag = 'input window, operand 1, single buffered']
    #allocation6 [shape = 's32[1]{0}', space=sflag, size = 0x4, scoped, tag = 'scoped memory for tpu_custom_call.1']
    #allocation7 [shape = 'u8[65536]{0}', space=vmem, size = 0x10000, scoped, tag = 'input window, operand 3, single buffered']
    #allocation8 [shape = 'u8[4096]{0}', space=vmem, size = 0x1000, scoped, tag = 'output window, operand 0, single buffered']
    %10 = vsyncpa [#allocation3], 0
    %11 = vsyncpa [#allocation6], 0
    %12 = vsyncpa [#allocation4], 0
    // Predicated region
    $region2: #{tpu_custom_call.1} parent=1 // pred_check
      _
    $region3: #{tpu_custom_call.1} parent=1 // pred_check_branch
      %14 = sbr.rel (0) target = $region5
    $region4: #{tpu_custom_call.1} parent=1 // pred_region
      %16 = vsyncadd [#allocation3], 0
      %s18 = sshll.u32 %s0, 4
      %s19 = int_to_ptr.hbm [resolvable:$true] %s18
      %s20 = sshll.u32 [#allocation2], 4
      %s21 = int_to_ptr.vmem [resolvable:$true] %s20
      %23 = dma.hbm_to_vmem [thread:$0]  %s19, 128, %s21, [#allocation3]
    $region5: #{tpu_custom_call.1} parent=1 // pred_fallthru
      _
    // Predicated region
    $region6: #{tpu_custom_call.1} parent=1 // pred_check
      _
    $region7: #{tpu_custom_call.1} parent=1 // pred_check_branch
      %25 = sbr.rel (0) target = $region9
    $region8: #{tpu_custom_call.1} parent=1 // pred_region
      %27 = vsyncadd [#allocation6], 0
      %s28 = sshll.u32 %s1, 4
      %s29 = int_to_ptr.hbm [resolvable:$true] %s28
      %s30 = sshll.u32 [#allocation5], 4
      %s31 = int_to_ptr.vmem [resolvable:$true] %s30
      %36 = dma.hbm_to_vmem [thread:$0]  %s29, 512, %s31, [#allocation6], 128, 128, 8
    $region9: #{tpu_custom_call.1} parent=1 // pred_fallthru
      _
    // Predicated region
    $region10: #{tpu_custom_call.1} parent=1 // pred_check
      _
    $region11: #{tpu_custom_call.1} parent=1 // pred_check_branch
      %38 = sbr.rel (0) target = $region13
    $region12: #{tpu_custom_call.1} parent=1 // pred_region
      _
    $region13: #{tpu_custom_call.1} parent=1 // pred_fallthru
      _
    // Predicated region
    $region14: #{tpu_custom_call.1} parent=1 // pred_check
      _
    $region15: #{tpu_custom_call.1} parent=1 // pred_check_branch
      %40 = sbr.rel (0) target = $region17
    $region16: #{tpu_custom_call.1} parent=1 // pred_region
      %42 = vsyncadd [#allocation6], 0
      %s43 = sshll.u32 %s3, 4
      %s44 = int_to_ptr.hbm [resolvable:$true] %s43
      %s45 = sshll.u32 [#allocation7], 4
      %s46 = int_to_ptr.vmem [resolvable:$true] %s45
      %51 = dma.hbm_to_vmem [thread:$0]  %s44, 2048, %s46, [#allocation6], 128, 128, 8
    $region17: #{tpu_custom_call.1} parent=1 // pred_fallthru
      _
    // Predicated region
    $region18: #{tpu_custom_call.1} parent=1 // pred_check
      _
    $region19: #{tpu_custom_call.1} parent=1 // pred_check_branch
      %53 = sbr.rel (0) target = $region21
    $region20: #{tpu_custom_call.1} parent=1 // pred_region
      _
    $region21: #{tpu_custom_call.1} parent=1 // pred_fallthru
      _
    // Predicated region
    $region22: #{tpu_custom_call.1} parent=1 // pred_check
      _
    $region23: #{tpu_custom_call.1} parent=1 // pred_check_branch
      %55 = sbr.rel (0) target = $region25
    $region24: #{tpu_custom_call.1} parent=1 // pred_region
      %57 = dma.done [#allocation3], 128
    $region25: #{tpu_custom_call.1} parent=1 // pred_fallthru
      _
    // Predicated region
    $region26: #{tpu_custom_call.1} parent=1 // pred_check
      _
    $region27: #{tpu_custom_call.1} parent=1 // pred_check_branch
      %59 = sbr.rel (0) target = $region29
    $region28: #{tpu_custom_call.1} parent=1 // pred_region
      %61 = dma.done [#allocation6], 512
    $region29: #{tpu_custom_call.1} parent=1 // pred_fallthru
      _
    // Predicated region
    $region30: #{tpu_custom_call.1} parent=1 // pred_check
      _
    $region31: #{tpu_custom_call.1} parent=1 // pred_check_branch
      %63 = sbr.rel (0) target = $region33
    $region32: #{tpu_custom_call.1} parent=1 // pred_region
      %65 = dma.done [#allocation6], 2048
    $region33: #{tpu_custom_call.1} parent=1 // pred_fallthru
      _
    %v66 = vld [vmem:[#allocation2] sm:$0xff]
    %v67 = vld [vmem:[#allocation5] sm:$0xff]
    %v68 = vld [vmem:[#allocation5 + $0x8] sm:$0xff]
    %v69 = vld [vmem:[#allocation5 + $0x10] sm:$0xff]
    %v70 = vld [vmem:[#allocation5 + $0x18] sm:$0xff]
    %v71 = vld [vmem:[%s2] sm:$0x1]
    %v73 = vperm.slane %v71, 0
    %vm75 = vcmask 261120
    %v77 = vsel %vm75, %v66, 0
    %79 = vmatpush.msra.mxu0 0.0
    %80 = vmatpush.msra.mxu0 0.0
    %81 = vmatpush.msra.mxu0 0.0
    %82 = vmatpush.msra.mxu0 0.0
    %83 = vmatpush.msra.mxu0 0.0
    %84 = vmatpush.msra.mxu0 0.0
    %85 = vmatpush.msra.mxu0 0.0
    %86 = vmatpush.msra.mxu0 0.0
    %87 = vmatpush.msra.mxu0 0.0
    %88 = vmatpush.msra.mxu0 0.0
    %89 = vmatpush.msra.mxu0 0.0
    %90 = vmatpush.msra.mxu0 0.0
    %91 = vmatpush.msra.mxu0 %v70
    %92 = vmatpush.msra.mxu0 %v69
    %93 = vmatpush.msra.mxu0 %v68
    %94 = vmatpush.msra.mxu0 %v67
    %95 = vmatmul.f32.gmra.mxu0 %v77
    %v96 = vpop.f32.mrf.mxu0
    %v97 = vadd.f32 %v73, %v96
    %98 = vdwg.mxu0
    %v99 = vmax.f32 %v97, 0.0
    %v100 = vld [vmem:[#allocation7] sm:$0xff]
    %v101 = vld [vmem:[#allocation7 + $0x8] sm:$0xff]
    %v102 = vld [vmem:[#allocation7 + $0x10] sm:$0xff]
    %v103 = vld [vmem:[#allocation7 + $0x18] sm:$0xff]
    %v104 = vld [vmem:[#allocation7 + $0x20] sm:$0xff]
    %v105 = vld [vmem:[#allocation7 + $0x28] sm:$0xff]
    %v106 = vld [vmem:[#allocation7 + $0x30] sm:$0xff]
    %v107 = vld [vmem:[#allocation7 + $0x38] sm:$0xff]
    %v108 = vld [vmem:[#allocation7 + $0x40] sm:$0xff]
    %v109 = vld [vmem:[#allocation7 + $0x48] sm:$0xff]
    %v110 = vld [vmem:[#allocation7 + $0x50] sm:$0xff]
    %v111 = vld [vmem:[#allocation7 + $0x58] sm:$0xff]
    %v112 = vld [vmem:[#allocation7 + $0x60] sm:$0xff]
    %v113 = vld [vmem:[#allocation7 + $0x68] sm:$0xff]
    %v114 = vld [vmem:[#allocation7 + $0x70] sm:$0xff]
    %v115 = vld [vmem:[#allocation7 + $0x78] sm:$0xff]
    %v116 = vld [vmem:[%s4] sm:$0x1]
    %v118 = vperm.slane %v116, 0
    %120 = vmatpush.msra.mxu0 %v115
    %121 = vmatpush.msra.mxu0 %v114
    %122 = vmatpush.msra.mxu0 %v113
    %123 = vmatpush.msra.mxu0 %v112
    %124 = vmatpush.msra.mxu0 %v111
    %125 = vmatpush.msra.mxu0 %v110
    %126 = vmatpush.msra.mxu0 %v109
    %127 = vmatpush.msra.mxu0 %v108
    %128 = vmatpush.msra.mxu0 %v107
    %129 = vmatpush.msra.mxu0 %v106
    %130 = vmatpush.msra.mxu0 %v105
    %131 = vmatpush.msra.mxu0 %v104
    %132 = vmatpush.msra.mxu0 %v103
    %133 = vmatpush.msra.mxu0 %v102
    %134 = vmatpush.msra.mxu0 %v101
    %135 = vmatpush.msra.mxu0 %v100
    %136 = vmatmul.f32.gmra.mxu0 %v99
    %v137 = vpop.f32.mrf.mxu0
    %v138 = vadd.f32 %v118, %v137
    %139 = vdwg.mxu0
    %140 = vst [vmem:[#allocation8] sm:$0xff] %v138
    // Predicated region
    $region34: #{tpu_custom_call.1} parent=1 // pred_check
      _
    $region35: #{tpu_custom_call.1} parent=1 // pred_check_branch
      %142 = sbr.rel (0) target = $region37
    $region36: #{tpu_custom_call.1} parent=1 // pred_region
      %144 = vsyncadd [#allocation4], 0
      %s146 = sshll.u32 [#allocation8], 4
      %s147 = int_to_ptr.vmem [resolvable:$true] %s146
      %s148 = sshll.u32 %s5, 4
      %s149 = int_to_ptr.hbm [resolvable:$true] %s148
      %151 = dma.vmem_to_hbm [thread:$0]  %s147, 128, %s149, [#allocation4]
    $region37: #{tpu_custom_call.1} parent=1 // pred_fallthru
      _
    // Predicated region
    $region38: #{tpu_custom_call.1} parent=1 // pred_check
      _
    $region39: #{tpu_custom_call.1} parent=1 // pred_check_branch
      %153 = sbr.rel (0) target = $region41
    $region40: #{tpu_custom_call.1} parent=1 // pred_region
      %155 = dma.done [#allocation4], 128
    $region41: #{tpu_custom_call.1} parent=1 // pred_fallthru
      _
    %156 = vsyncpa [#allocation3], 1
    %157 = vsyncpa [#allocation6], 1
    %158 = vsyncpa [#allocation4], 1

</llo_original>
